<compile_context>
chip_gen: v7x
topology: tpu7x:2x2x1
jax: 0.10.0
libtpu: 0.0.40
codegen_flags: <defaults>
</compile_context>

<pallas_src>
import jax
import jax.numpy as jnp
import numpy as np
from jax import lax
from jax.experimental import pallas as pl
from jax.experimental.pallas import tpu as pltpu


# ---------------------------------------------------------------------------
# Fused (matmul + BN shift + PReLU) Pallas kernel.  BN scale is pre-folded
# into the weights in the wrapper, so the epilogue is bias + PReLU only.
# ---------------------------------------------------------------------------
def _matmul_bias_prelu_kernel(x_ref, w_ref, b_ref, a_ref, o_ref, acc_ref):
    # x_ref: (tm, tk), w_ref: (tk, tn), b/a: (1, tn), o_ref: (tm, tn)
    @pl.when(pl.program_id(2) == 0)
    def _init():
        acc_ref[...] = jnp.zeros_like(acc_ref)

    acc_ref[...] += jnp.dot(x_ref[...], w_ref[...],
                            preferred_element_type=jnp.float32)

    @pl.when(pl.program_id(2) == pl.num_programs(2) - 1)
    def _finalize():
        y = acc_ref[...] + b_ref[...]                       # folded BN (eval)
        o_ref[...] = jnp.where(y >= 0.0, y, a_ref[...] * y).astype(o_ref.dtype)


def _pick_tile(dim, target, align):
    """Largest tile dividing `dim`, <= target, multiple of `align`
    (TPU (8,128) layout rule). Falls back to the full dimension."""
    if dim <= target:
        return dim
    t = (target // align) * align
    while t >= align:
        if dim % t == 0:
            return t
        t -= align
    return dim


def conv_bn_prelu(x2d, w, scale, shift, alpha, *, matmul_dtype=jnp.float32):
    """x2d: (M, K) f32, w: (K, N), scale/shift/alpha: (N,) -> (M, N) f32."""
    M, K = x2d.shape
    Kw, N = w.shape
    assert K == Kw

    # Tiles: big M tile (cuts re-reads of the large 3x3 weight matrices),
    # lane-dense N tile, K tile sized so the double-buffered working set
    # stays ~18 MiB.
    tm = _pick_tile(M, 1024, 8)
    tn = _pick_tile(N, 512, 128)
    tk = _pick_tile(K, 1024, 128)

    # Fold eval-mode BN scale into the weights (exact: per-output-channel).
    w = w * scale[None, :].astype(w.dtype)

    if matmul_dtype != jnp.float32:
        x2d = x2d.astype(matmul_dtype)
        w = w.astype(matmul_dtype)

    b = shift.reshape(1, N).astype(jnp.float32)
    a = alpha.reshape(1, N).astype(jnp.float32)

    grid = (M // tm, N // tn, K // tk)
    return pl.pallas_call(
        _matmul_bias_prelu_kernel,
        out_shape=jax.ShapeDtypeStruct((M, N), jnp.float32),
        grid=grid,
        in_specs=[
            pl.BlockSpec((tm, tk), lambda i, j, k: (i, k)),
            pl.BlockSpec((tk, tn), lambda i, j, k: (k, j)),
            pl.BlockSpec((1, tn), lambda i, j, k: (0, j)),
            pl.BlockSpec((1, tn), lambda i, j, k: (0, j)),
        ],
        out_specs=pl.BlockSpec((tm, tn), lambda i, j, k: (i, j)),
        scratch_shapes=[pltpu.VMEM((tm, tn), jnp.float32)],
        compiler_params=pltpu.CompilerParams(
            dimension_semantics=("parallel", "parallel", "arbitrary"),
            vmem_limit_bytes=48 * 1024 * 1024),
    )(x2d, w, b, a)


# ---------------------------------------------------------------------------
# Layout plumbing (pure JAX): GPM grid shuffles and 3x3 im2col.
# ---------------------------------------------------------------------------
def _grid_split(x, n):
    """NHWC (N,H,W,D) -> (N, H/n, W/n, n*n*D). Channel order matches the
    PyTorch chunk/cat: block index (hi, wi) row-major, D channels each."""
    N, H, W, D = x.shape
    x = x.reshape(N, n, H // n, n, W // n, D)
    x = jnp.transpose(x, (0, 2, 4, 1, 3, 5))
    return x.reshape(N, H // n, W // n, n * n * D)


def _grid_merge(x, n):
    """Inverse of _grid_split."""
    N, Hs, Ws, C = x.shape
    D = C // (n * n)
    x = x.reshape(N, Hs, Ws, n, n, D)
    x = jnp.transpose(x, (0, 3, 1, 4, 2, 5))
    return x.reshape(N, n * Hs, n * Ws, D)


def _im2col_3x3(x):
    """NHWC (N,Hs,Ws,C) -> (N*Hs*Ws, 9*C), 3x3 window, zero padding 1.
    Column order is (dy, dx, cin), matching the reshaped conv weight."""
    N, Hs, Ws, C = x.shape
    xp = jnp.pad(x, ((0, 0), (1, 1), (1, 1), (0, 0)))
    taps = [xp[:, dy:dy + Hs, dx:dx + Ws, :]
            for dy in range(3) for dx in range(3)]
    patches = jnp.concatenate(taps, axis=-1)
    return patches.reshape(N * Hs * Ws, 9 * C)


# ---------------------------------------------------------------------------
# GPM forward (Pallas path).
# ---------------------------------------------------------------------------
def gpm_forward(x_nchw, params, *, matmul_dtype=jnp.float32):
    """x_nchw: (N, in_dim, H, W) f32 -> (N, down_dim, H, W) f32."""
    N, Cin, H, W = x_nchw.shape
    D = params["w1"].shape[1]
    assert H % 12 == 0 and W % 12 == 0, "spatial dims must divide 2, 4 and 6"

    x = jnp.transpose(x_nchw, (0, 2, 3, 1)).astype(jnp.float32)   # NHWC

    conv1 = conv_bn_prelu(x.reshape(N * H * W, Cin), params["w1"],
                          params["s1"], params["b1"], params["a1"],
                          matmul_dtype=matmul_dtype).reshape(N, H, W, D)

    def pyramid_branch(n, w, s, b, a):
        g = _grid_split(conv1, n)                    # (N, H/n, W/n, n*n*D)
        Nb, Hs, Ws, C = g.shape
        patches = _im2col_3x3(g)                     # (N*Hs*Ws, 9*C)
        y = conv_bn_prelu(patches, w, s, b, a, matmul_dtype=matmul_dtype)
        return _grid_merge(y.reshape(Nb, Hs, Ws, C), n)   # (N, H, W, D)

    gm1 = pyramid_branch(2, params["w2"], params["s2"], params["b2"], params["a2"])
    gm2 = pyramid_branch(4, params["w3"], params["s3"], params["b3"], params["a3"])
    gm3 = pyramid_branch(6, params["w4"], params["s4"], params["b4"], params["a4"])

    fuse_in = jnp.concatenate([gm1, gm2, gm3], axis=-1)           # (N, H, W, 3D)
    out = conv_bn_prelu(fuse_in.reshape(N * H * W, 3 * D), params["w5"],
                        params["s5"], params["b5"], params["a5"],
                        matmul_dtype=matmul_dtype).reshape(N, H, W, D)
    return jnp.transpose(out, (0, 3, 1, 2))                       # NCHW


# ---------------------------------------------------------------------------
# Deterministic parameter construction (BN folded, eval mode; PReLU slope).
# ---------------------------------------------------------------------------
def make_params(key, in_dim, down_dim):
    D = down_dim
    eps = 1e-5
    keys = iter(jax.random.split(key, 64))

    def bn(c):
        gamma = 1.0 + 0.1 * jax.random.normal(next(keys), (c,), jnp.float32)
        beta = 0.1 * jax.random.normal(next(keys), (c,), jnp.float32)
        mean = 0.1 * jax.random.normal(next(keys), (c,), jnp.float32)
        var = jax.random.uniform(next(keys), (c,), jnp.float32, 0.5, 1.5)
        scale = gamma / jnp.sqrt(var + eps)
        return scale, beta - mean * scale

    def conv_w(fan_in, fan_out):
        return (jax.random.normal(next(keys), (fan_in, fan_out), jnp.float32)
                / jnp.sqrt(float(fan_in)))

    def prelu(c):
        # nn.PReLU() default: one shared slope; broadcast to per-channel vec.
        slope = 0.25 + 0.05 * jax.random.normal(next(keys), (), jnp.float32)
        return jnp.full((c,), slope, jnp.float32)

    p = {}
    p["w1"] = conv_w(in_dim, D);   p["s1"], p["b1"] = bn(D);      p["a1"] = prelu(D)
    c2 = 4 * D
    p["w2"] = conv_w(9 * c2, c2);  p["s2"], p["b2"] = bn(c2);     p["a2"] = prelu(c2)
    c3 = 16 * D
    p["w3"] = conv_w(9 * c3, c3);  p["s3"], p["b3"] = bn(c3);     p["a3"] = prelu(c3)
    c4 = 36 * D
    p["w4"] = conv_w(9 * c4, c4);  p["s4"], p["b4"] = bn(c4);     p["a4"] = prelu(c4)
    p["w5"] = conv_w(3 * D, D);    p["s5"], p["b5"] = bn(D);      p["a5"] = prelu(D)
    return p


# ---------------------------------------------------------------------------
# Pure-JAX reference that mirrors the PyTorch forward (chunk/cat + lax conv).
# ---------------------------------------------------------------------------
def reference_gpm(x_nchw, params):
    def bn_prelu(y, s, b, a):
        y = y * s[None, :, None, None] + b[None, :, None, None]
        return jnp.where(y >= 0.0, y, a[None, :, None, None] * y)

    def conv1x1(x, w, s, b, a):
        return bn_prelu(jnp.einsum("nchw,cd->ndhw", x, w), s, b, a)

    def conv3x3(x, w_mat, s, b, a):
        C = x.shape[1]
        w_hwio = w_mat.reshape(3, 3, C, w_mat.shape[1])
        y = lax.conv_general_dilated(
            x, w_hwio, window_strides=(1, 1), padding=((1, 1), (1, 1)),
            dimension_numbers=("NCHW", "HWIO", "NCHW"))
        return bn_prelu(y, s, b, a)

    conv1 = conv1x1(x_nchw, params["w1"], params["s1"], params["b1"], params["a1"])

    def branch(n, w, s, b, a):
        h_chunks = jnp.split(conv1, n, axis=2)
        cols = []
        for i in range(n):
            w_chunks = jnp.split(h_chunks[i], n, axis=3)
            cols.append(jnp.concatenate(w_chunks, axis=1))
        gm = jnp.concatenate(cols, axis=1)
        gm = conv3x3(gm, w, s, b, a)
        ch = jnp.split(gm, n * n, axis=1)
        rows = [jnp.concatenate(ch[n * i:n * i + n], axis=3) for i in range(n)]
        return jnp.concatenate(rows, axis=2)

    gm1 = branch(2, params["w2"], params["s2"], params["b2"], params["a2"])
    gm2 = branch(4, params["w3"], params["s3"], params["b3"], params["a3"])
    gm3 = branch(6, params["w4"], params["s4"], params["b4"], params["a4"])
    fuse_in = jnp.concatenate([gm1, gm2, gm3], axis=1)
    return conv1x1(fuse_in, params["w5"], params["s5"], params["b5"], params["a5"])


if __name__ == "__main__":
    # TODO(synk): the original module hard-codes down_dim=512; it is kept as a
    # parameter here so the self-test runs at small shapes (same structure).
    N, in_dim, H, W = 2, 16, 12, 12      # spatial must divide 2, 4 and 6
    down_dim = 8

    key = jax.random.PRNGKey(0)
    kx, kp = jax.random.split(key)
    x = jax.random.normal(kx, (N, in_dim, H, W), jnp.float32)
    params = make_params(kp, in_dim, down_dim)

    out = jax.block_until_ready(gpm_forward(x, params))
    ref = jax.block_until_ready(reference_gpm(x, params))

    assert out.shape == (N, down_dim, H, W)
    np.testing.assert_allclose(np.asarray(out), np.asarray(ref),
                               rtol=1e-2, atol=1e-2)
    print("KERNEL_OK")
</pallas_src>

<mosaic_0001>
module attributes {stable_mosaic.version = 11 : i64} {
  func.func @_matmul_bias_prelu_kernel(%arg0: i32, %arg1: i32, %arg2: i32, %arg3: memref<288x16xf32, #tpu.memory_space<vmem>>, %arg4: memref<16x8xf32, #tpu.memory_space<vmem>>, %arg5: memref<1x8xf32, #tpu.memory_space<vmem>>, %arg6: memref<1x8xf32, #tpu.memory_space<vmem>>, %arg7: memref<288x8xf32, #tpu.memory_space<vmem>>, %arg8: memref<288x8xf32, #tpu.memory_space<vmem>>) attributes {dimension_semantics = [#tpu.dimension_semantics<parallel>, #tpu.dimension_semantics<parallel>, #tpu.dimension_semantics<arbitrary>], iteration_bounds = array<i64: 1, 1, 1>, scalar_prefetch = 0 : i64, scratch_operands = 1 : i64, tpu.core_type = #tpu.core_type<tc>, window_params = [{transform_indices = @transform_0, window_bounds = array<i64: 288, 16>}, {transform_indices = @transform_1, window_bounds = array<i64: 16, 8>}, {transform_indices = @transform_2, window_bounds = array<i64: 1, 8>}, {transform_indices = @transform_3, window_bounds = array<i64: 1, 8>}, {transform_indices = @transform_4, window_bounds = array<i64: 288, 8>}]} {
    %c0_i32 = arith.constant 0 : i32
    %0 = arith.cmpi eq, %arg2, %c0_i32 : i32
    %1 = arith.extui %0 : i1 to i32
    %c0_i32_0 = arith.constant 0 : i32
    %2 = arith.cmpi ne, %1, %c0_i32_0 : i32
    scf.if %2 {
      %cst_10 = arith.constant 0.000000e+00 : f32
      %12 = vector.broadcast %cst_10 : f32 to vector<288x8xf32>
      %c0_11 = arith.constant 0 : index
      %c0_12 = arith.constant 0 : index
      %13 = vector.load %arg8[%c0_11, %c0_12] : memref<288x8xf32, #tpu.memory_space<vmem>>, vector<288x8xf32>
      tpu.vector_store %arg8[%c0_11, %c0_12], %12 {strides = array<i32>} : memref<288x8xf32, #tpu.memory_space<vmem>>, vector<288x8xf32>,
    } else {
    }
    %c0 = arith.constant 0 : index
    %c0_1 = arith.constant 0 : index
    %3 = vector.load %arg8[%c0, %c0_1] : memref<288x8xf32, #tpu.memory_space<vmem>>, vector<288x8xf32>
    %c0_2 = arith.constant 0 : index
    %c0_3 = arith.constant 0 : index
    %4 = vector.load %arg3[%c0_2, %c0_3] : memref<288x16xf32, #tpu.memory_space<vmem>>, vector<288x16xf32>
    %c0_4 = arith.constant 0 : index
    %c0_5 = arith.constant 0 : index
    %5 = vector.load %arg4[%c0_4, %c0_5] : memref<16x8xf32, #tpu.memory_space<vmem>>, vector<16x8xf32>
    %cst = arith.constant dense<0.000000e+00> : vector<288x8xf32>
    %6 = tpu.matmul %4, %5, %cst {dimension_numbers = #tpu.dot_dimension_numbers<[1], [0], [0], [1], [0, 0, 1, 1], [], []>} : vector<288x16xf32>, vector<16x8xf32>, vector<288x8xf32> -> vector<288x8xf32>
    %7 = arith.addf %3, %6 : vector<288x8xf32>
    %c0_6 = arith.constant 0 : index
    %c0_7 = arith.constant 0 : index
    %8 = vector.load %arg8[%c0_6, %c0_7] : memref<288x8xf32, #tpu.memory_space<vmem>>, vector<288x8xf32>
    tpu.vector_store %arg8[%c0_6, %c0_7], %7 {strides = array<i32>} : memref<288x8xf32, #tpu.memory_space<vmem>>, vector<288x8xf32>,
    %c0_i32_8 = arith.constant 0 : i32
    %9 = arith.cmpi eq, %arg2, %c0_i32_8 : i32
    %10 = arith.extui %9 : i1 to i32
    %c0_i32_9 = arith.constant 0 : i32
    %11 = arith.cmpi ne, %10, %c0_i32_9 : i32
    scf.if %11 {
      %c0_10 = arith.constant 0 : index
      %c0_11 = arith.constant 0 : index
      %12 = vector.load %arg8[%c0_10, %c0_11] : memref<288x8xf32, #tpu.memory_space<vmem>>, vector<288x8xf32>
      %c0_12 = arith.constant 0 : index
      %c0_13 = arith.constant 0 : index
      %13 = vector.load %arg5[%c0_12, %c0_13] : memref<1x8xf32, #tpu.memory_space<vmem>>, vector<1x8xf32>
      %14 = vector.broadcast %13 : vector<1x8xf32> to vector<288x8xf32>
      %15 = arith.addf %12, %14 : vector<288x8xf32>
      %cst_14 = arith.constant 0.000000e+00 : f32
      %16 = vector.broadcast %cst_14 : f32 to vector<288x8xf32>
      %17 = arith.cmpf oge, %15, %16 : vector<288x8xf32>
      %c0_15 = arith.constant 0 : index
      %c0_16 = arith.constant 0 : index
      %18 = vector.load %arg6[%c0_15, %c0_16] : memref<1x8xf32, #tpu.memory_space<vmem>>, vector<1x8xf32>
      %19 = vector.broadcast %18 : vector<1x8xf32> to vector<288x8xf32>
      %20 = arith.mulf %19, %15 : vector<288x8xf32>
      %21 = arith.select %17, %15, %20 : vector<288x8xi1>, vector<288x8xf32>
      %c0_17 = arith.constant 0 : index
      %c0_18 = arith.constant 0 : index
      %22 = vector.load %arg7[%c0_17, %c0_18] : memref<288x8xf32, #tpu.memory_space<vmem>>, vector<288x8xf32>
      tpu.vector_store %arg7[%c0_17, %c0_18], %21 {strides = array<i32>} : memref<288x8xf32, #tpu.memory_space<vmem>>, vector<288x8xf32>,
    } else {
    }
    return
  }
  func.func @transform_0(%arg0: i32, %arg1: i32, %arg2: i32) -> (i32, i32) {
    %c0_i32 = arith.constant 0 : i32
    return %arg0, %arg2 : i32, i32
  }
  func.func @transform_1(%arg0: i32, %arg1: i32, %arg2: i32) -> (i32, i32) {
    %c0_i32 = arith.constant 0 : i32
    return %arg2, %arg1 : i32, i32
  }
  func.func @transform_2(%arg0: i32, %arg1: i32, %arg2: i32) -> (i32, i32) {
    %c0_i32 = arith.constant 0 : i32
    %c0_i32_0 = arith.constant 0 : i32
    return %c0_i32, %arg1 : i32, i32
  }
  func.func @transform_3(%arg0: i32, %arg1: i32, %arg2: i32) -> (i32, i32) {
    %c0_i32 = arith.constant 0 : i32
    %c0_i32_0 = arith.constant 0 : i32
    return %c0_i32, %arg1 : i32, i32
  }
  func.func @transform_4(%arg0: i32, %arg1: i32, %arg2: i32) -> (i32, i32) {
    %c0_i32 = arith.constant 0 : i32
    return %arg0, %arg1 : i32, i32
  }
}

</mosaic_0001>

<llo_original>
// kernel: tpu_custom_call.1
$region0: #{tpu_custom_call.1}
  #allocation0 [shape = 'u32[]', space=smem, size = 0x4, offset = 0x4, fixed_abs, tag = 'smem constant byte address 0x4 - core index']
  #allocation1 [shape = 'u32[144,128]{1,0:T(1,128)}', space=vmem, size = 0x12000, scoped, tag = 'internal scratch']
  #allocation2 [shape = 'f32[288,8]{1,0:T(8,128)}', space=vmem, size = 0x24000, scoped, tag = 'scratch operand']
  %s0 = inlined_call_operand.vmem [shape: f32[288,16], index: 0, kind: input, shape index: {}]
  %s1 = inlined_call_operand.vmem [shape: f32[16,8], index: 1, kind: input, shape index: {}]
  %s2 = inlined_call_operand.vmem [shape: f32[1,8], index: 2, kind: input, shape index: {}]
  %s3 = inlined_call_operand.vmem [shape: f32[1,8], index: 3, kind: input, shape index: {}]
  %s4 = inlined_call_operand.vmem [shape: f32[288,8], index: 4, kind: output, shape index: {}]
  %s5 = sld [smem:[#allocation0]]
  $region34: #{tpu_custom_call.1} parent=0
    _
  %s7 = ssub.s32 1, %s5
  %s8 = scalar_select 0, %s7, %s5
  // Predicated region
  $region2: #{tpu_custom_call.1} parent=0 // pred_check
    _
  $region3: #{tpu_custom_call.1} parent=0 // pred_check_branch
    %10 = sbr.rel (0) target = $region5
  $region4: #{tpu_custom_call.1} parent=0 // pred_region
    _
  $region5: #{tpu_custom_call.1} parent=0 // pred_fallthru
    _
  // Predicated region
  $region6: #{tpu_custom_call.1} parent=0 // pred_check
    _
  $region7: #{tpu_custom_call.1} parent=0 // pred_check_branch
    %12 = sbr.rel (0) target = $region9
  $region8: #{tpu_custom_call.1} parent=0 // pred_region
    _
  $region9: #{tpu_custom_call.1} parent=0 // pred_fallthru
    _
  // Predicated region
  $region10: #{tpu_custom_call.1} parent=0 // pred_check
    _
  $region11: #{tpu_custom_call.1} parent=0 // pred_check_branch
    %14 = sbr.rel (0) target = $region13
  $region12: #{tpu_custom_call.1} parent=0 // pred_region
    _
  $region13: #{tpu_custom_call.1} parent=0 // pred_fallthru
    _
  // Predicated region
  $region14: #{tpu_custom_call.1} parent=0 // pred_check
    _
  $region15: #{tpu_custom_call.1} parent=0 // pred_check_branch
    %16 = sbr.rel (0) target = $region17
  $region16: #{tpu_custom_call.1} parent=0 // pred_region
    _
  $region17: #{tpu_custom_call.1} parent=0 // pred_fallthru
    _
  %p17 = scmp.eq.s32.totalorder 0, 0
  // Predicated region
  $region18: #{tpu_custom_call.1} parent=0 // pred_check
    %p18 = pneg %p17
  $region19: #{tpu_custom_call.1} parent=0 // pred_check_branch
    %20 = sbr.rel (%p18) target = $region21
  $region20: #{tpu_custom_call.1} parent=0 // pred_region
    %vm21 = vcmask 64512
    %22 = vst.msk [vmem:[#allocation2] sm:$0xff] %vm21, 0.0
    %23 = vst.msk [vmem:[#allocation2 + $0x8] sm:$0xff] %vm21, 0.0
    %24 = vst.msk [vmem:[#allocation2 + $0x10] sm:$0xff] %vm21, 0.0
    %25 = vst.msk [vmem:[#allocation2 + $0x18] sm:$0xff] %vm21, 0.0
    %26 = vst.msk [vmem:[#allocation2 + $0x20] sm:$0xff] %vm21, 0.0
    %27 = vst.msk [vmem:[#allocation2 + $0x28] sm:$0xff] %vm21, 0.0
    %28 = vst.msk [vmem:[#allocation2 + $0x30] sm:$0xff] %vm21, 0.0
    %29 = vst.msk [vmem:[#allocation2 + $0x38] sm:$0xff] %vm21, 0.0
    %30 = vst.msk [vmem:[#allocation2 + $0x40] sm:$0xff] %vm21, 0.0
    %31 = vst.msk [vmem:[#allocation2 + $0x48] sm:$0xff] %vm21, 0.0
    %32 = vst.msk [vmem:[#allocation2 + $0x50] sm:$0xff] %vm21, 0.0
    %33 = vst.msk [vmem:[#allocation2 + $0x58] sm:$0xff] %vm21, 0.0
    %34 = vst.msk [vmem:[#allocation2 + $0x60] sm:$0xff] %vm21, 0.0
    %35 = vst.msk [vmem:[#allocation2 + $0x68] sm:$0xff] %vm21, 0.0
    %36 = vst.msk [vmem:[#allocation2 + $0x70] sm:$0xff] %vm21, 0.0
    %37 = vst.msk [vmem:[#allocation2 + $0x78] sm:$0xff] %vm21, 0.0
    %38 = vst.msk [vmem:[#allocation2 + $0x80] sm:$0xff] %vm21, 0.0
    %39 = vst.msk [vmem:[#allocation2 + $0x88] sm:$0xff] %vm21, 0.0
    %40 = vst.msk [vmem:[#allocation2 + $0x90] sm:$0xff] %vm21, 0.0
    %41 = vst.msk [vmem:[#allocation2 + $0x98] sm:$0xff] %vm21, 0.0
    %42 = vst.msk [vmem:[#allocation2 + $0xa0] sm:$0xff] %vm21, 0.0
    %43 = vst.msk [vmem:[#allocation2 + $0xa8] sm:$0xff] %vm21, 0.0
    %44 = vst.msk [vmem:[#allocation2 + $0xb0] sm:$0xff] %vm21, 0.0
    %45 = vst.msk [vmem:[#allocation2 + $0xb8] sm:$0xff] %vm21, 0.0
    %46 = vst.msk [vmem:[#allocation2 + $0xc0] sm:$0xff] %vm21, 0.0
    %47 = vst.msk [vmem:[#allocation2 + $0xc8] sm:$0xff] %vm21, 0.0
    %48 = vst.msk [vmem:[#allocation2 + $0xd0] sm:$0xff] %vm21, 0.0
    %49 = vst.msk [vmem:[#allocation2 + $0xd8] sm:$0xff] %vm21, 0.0
    %50 = vst.msk [vmem:[#allocation2 + $0xe0] sm:$0xff] %vm21, 0.0
    %51 = vst.msk [vmem:[#allocation2 + $0xe8] sm:$0xff] %vm21, 0.0
    %52 = vst.msk [vmem:[#allocation2 + $0xf0] sm:$0xff] %vm21, 0.0
    %53 = vst.msk [vmem:[#allocation2 + $0xf8] sm:$0xff] %vm21, 0.0
    %54 = vst.msk [vmem:[#allocation2 + $0x100] sm:$0xff] %vm21, 0.0
    %55 = vst.msk [vmem:[#allocation2 + $0x108] sm:$0xff] %vm21, 0.0
    %56 = vst.msk [vmem:[#allocation2 + $0x110] sm:$0xff] %vm21, 0.0
    %57 = vst.msk [vmem:[#allocation2 + $0x118] sm:$0xff] %vm21, 0.0
  $region21: #{tpu_custom_call.1} parent=0 // pred_fallthru
    _
  %v58 = vld [vmem:[#allocation2] sm:$0xff]
  %v59 = vld [vmem:[#allocation2 + $0x8] sm:$0xff]
  %v60 = vld [vmem:[#allocation2 + $0x10] sm:$0xff]
  %v61 = vld [vmem:[#allocation2 + $0x18] sm:$0xff]
  %v62 = vld [vmem:[#allocation2 + $0x20] sm:$0xff]
  %v63 = vld [vmem:[#allocation2 + $0x28] sm:$0xff]
  %v64 = vld [vmem:[#allocation2 + $0x30] sm:$0xff]
  %v65 = vld [vmem:[#allocation2 + $0x38] sm:$0xff]
  %v66 = vld [vmem:[#allocation2 + $0x40] sm:$0xff]
  %v67 = vld [vmem:[#allocation2 + $0x48] sm:$0xff]
  %v68 = vld [vmem:[#allocation2 + $0x50] sm:$0xff]
  %v69 = vld [vmem:[#allocation2 + $0x58] sm:$0xff]
  %v70 = vld [vmem:[#allocation2 + $0x60] sm:$0xff]
  %v71 = vld [vmem:[#allocation2 + $0x68] sm:$0xff]
  %v72 = vld [vmem:[#allocation2 + $0x70] sm:$0xff]
  %v73 = vld [vmem:[#allocation2 + $0x78] sm:$0xff]
  %v74 = vld [vmem:[#allocation2 + $0x80] sm:$0xff]
  %v75 = vld [vmem:[#allocation2 + $0x88] sm:$0xff]
  %v76 = vld [vmem:[#allocation2 + $0x90] sm:$0xff]
  %v77 = vld [vmem:[#allocation2 + $0x98] sm:$0xff]
  %v78 = vld [vmem:[#allocation2 + $0xa0] sm:$0xff]
  %v79 = vld [vmem:[#allocation2 + $0xa8] sm:$0xff]
  %v80 = vld [vmem:[#allocation2 + $0xb0] sm:$0xff]
  %v81 = vld [vmem:[#allocation2 + $0xb8] sm:$0xff]
  %v82 = vld [vmem:[#allocation2 + $0xc0] sm:$0xff]
  %v83 = vld [vmem:[#allocation2 + $0xc8] sm:$0xff]
  %v84 = vld [vmem:[#allocation2 + $0xd0] sm:$0xff]
  %v85 = vld [vmem:[#allocation2 + $0xd8] sm:$0xff]
  %v86 = vld [vmem:[#allocation2 + $0xe0] sm:$0xff]
  %v87 = vld [vmem:[#allocation2 + $0xe8] sm:$0xff]
  %v88 = vld [vmem:[#allocation2 + $0xf0] sm:$0xff]
  %v89 = vld [vmem:[#allocation2 + $0xf8] sm:$0xff]
  %v90 = vld [vmem:[#allocation2 + $0x100] sm:$0xff]
  %v91 = vld [vmem:[#allocation2 + $0x108] sm:$0xff]
  %v92 = vld [vmem:[#allocation2 + $0x110] sm:$0xff]
  %v93 = vld [vmem:[#allocation2 + $0x118] sm:$0xff]
  %v94 = vld [vmem:[%s0] sm:$0xff]
  %v95 = vld [vmem:[%s0 + $0x8] sm:$0xff]
  %v96 = vld [vmem:[%s0 + $0x10] sm:$0xff]
  %v97 = vld [vmem:[%s0 + $0x18] sm:$0xff]
  %v98 = vld [vmem:[%s0 + $0x20] sm:$0xff]
  %v99 = vld [vmem:[%s0 + $0x28] sm:$0xff]
  %v100 = vld [vmem:[%s0 + $0x30] sm:$0xff]
  %v101 = vld [vmem:[%s0 + $0x38] sm:$0xff]
  %v102 = vld [vmem:[%s0 + $0x40] sm:$0xff]
  %v103 = vld [vmem:[%s0 + $0x48] sm:$0xff]
  %v104 = vld [vmem:[%s0 + $0x50] sm:$0xff]
  %v105 = vld [vmem:[%s0 + $0x58] sm:$0xff]
  %v106 = vld [vmem:[%s0 + $0x60] sm:$0xff]
  %v107 = vld [vmem:[%s0 + $0x68] sm:$0xff]
  %v108 = vld [vmem:[%s0 + $0x70] sm:$0xff]
  %v109 = vld [vmem:[%s0 + $0x78] sm:$0xff]
  %v110 = vld [vmem:[%s0 + $0x80] sm:$0xff]
  %v111 = vld [vmem:[%s0 + $0x88] sm:$0xff]
  %v112 = vld [vmem:[%s0 + $0x90] sm:$0xff]
  %v113 = vld [vmem:[%s0 + $0x98] sm:$0xff]
  %v114 = vld [vmem:[%s0 + $0xa0] sm:$0xff]
  %v115 = vld [vmem:[%s0 + $0xa8] sm:$0xff]
  %v116 = vld [vmem:[%s0 + $0xb0] sm:$0xff]
  %v117 = vld [vmem:[%s0 + $0xb8] sm:$0xff]
  %v118 = vld [vmem:[%s0 + $0xc0] sm:$0xff]
  %v119 = vld [vmem:[%s0 + $0xc8] sm:$0xff]
  %v120 = vld [vmem:[%s0 + $0xd0] sm:$0xff]
  %v121 = vld [vmem:[%s0 + $0xd8] sm:$0xff]
  %v122 = vld [vmem:[%s0 + $0xe0] sm:$0xff]
  %v123 = vld [vmem:[%s0 + $0xe8] sm:$0xff]
  %v124 = vld [vmem:[%s0 + $0xf0] sm:$0xff]
  %v125 = vld [vmem:[%s0 + $0xf8] sm:$0xff]
  %v126 = vld [vmem:[%s0 + $0x100] sm:$0xff]
  %v127 = vld [vmem:[%s0 + $0x108] sm:$0xff]
  %v128 = vld [vmem:[%s0 + $0x110] sm:$0xff]
  %v129 = vld [vmem:[%s0 + $0x118] sm:$0xff]
  %v130 = vld [vmem:[%s1] sm:$0xff]
  %v131 = vld [vmem:[%s1 + $0x8] sm:$0xff]
  %vm132 = vcmask 130048
  %v134 = vsel %vm132, %v94, 0
  %v137 = vsel %vm132, %v95, 0
  %v140 = vsel %vm132, %v96, 0
  %v143 = vsel %vm132, %v97, 0
  %v146 = vsel %vm132, %v98, 0
  %v149 = vsel %vm132, %v99, 0
  %v152 = vsel %vm132, %v100, 0
  %v155 = vsel %vm132, %v101, 0
  %v158 = vsel %vm132, %v102, 0
  %v161 = vsel %vm132, %v103, 0
  %v164 = vsel %vm132, %v104, 0
  %v167 = vsel %vm132, %v105, 0
  %v170 = vsel %vm132, %v106, 0
  %v173 = vsel %vm132, %v107, 0
  %v176 = vsel %vm132, %v108, 0
  %v179 = vsel %vm132, %v109, 0
  %v182 = vsel %vm132, %v110, 0
  %v185 = vsel %vm132, %v111, 0
  %v188 = vsel %vm132, %v112, 0
  %v191 = vsel %vm132, %v113, 0
  %v194 = vsel %vm132, %v114, 0
  %v197 = vsel %vm132, %v115, 0
  %v200 = vsel %vm132, %v116, 0
  %v203 = vsel %vm132, %v117, 0
  %v206 = vsel %vm132, %v118, 0
  %v209 = vsel %vm132, %v119, 0
  %v212 = vsel %vm132, %v120, 0
  %v215 = vsel %vm132, %v121, 0
  %v218 = vsel %vm132, %v122, 0
  %v221 = vsel %vm132, %v123, 0
  %v224 = vsel %vm132, %v124, 0
  %v227 = vsel %vm132, %v125, 0
  %v230 = vsel %vm132, %v126, 0
  %v233 = vsel %vm132, %v127, 0
  %v236 = vsel %vm132, %v128, 0
  %v239 = vsel %vm132, %v129, 0
  %241 = vmatprep.subr.mxu0 0.0
  %242 = vmatpush1.msra.mxu0 %v130
  %243 = vmatprep.subr.mxu0 0.0
  %244 = vmatpush1.msra.mxu0 %v131
  %245 = vmatprep.subr.mxu0 0.0
  %246 = vmatpush1.msra.mxu0 0.0
  %247 = vmatprep.subr.mxu0 0.0
  %248 = vmatpush1.msra.mxu0 0.0
  %249 = vmatprep.subr.mxu0 0.0
  %250 = vmatpush1.msra.mxu0 0.0
  %251 = vmatprep.subr.mxu0 0.0
  %252 = vmatpush1.msra.mxu0 0.0
  %253 = vmatprep.subr.mxu0 0.0
  %254 = vmatpush1.msra.mxu0 0.0
  %255 = vmatprep.subr.mxu0 0.0
  %256 = vmatpush1.msra.mxu0 0.0
  %257 = vmatprep.subr.mxu0 0.0
  %258 = vmatpush1.msra.mxu0 0.0
  %259 = vmatprep.subr.mxu0 0.0
  %260 = vmatpush1.msra.mxu0 0.0
  %261 = vmatprep.subr.mxu0 0.0
  %262 = vmatpush1.msra.mxu0 0.0
  %263 = vmatprep.subr.mxu0 0.0
  %264 = vmatpush1.msra.mxu0 0.0
  %265 = vmatprep.subr.mxu0 0.0
  %266 = vmatpush1.msra.mxu0 0.0
  %267 = vmatprep.subr.mxu0 0.0
  %268 = vmatpush1.msra.mxu0 0.0
  %269 = vmatprep.subr.mxu0 0.0
  %270 = vmatpush1.msra.mxu0 0.0
  %271 = vmatprep.subr.mxu0 0.0
  %272 = vmatpush1.msra.mxu0 0.0
  %273 = vmatprep.subr.mxu0 0.0
  %274 = vmatpush1.msra.mxu0 0.0
  %275 = vmatprep.subr.mxu0 0.0
  %276 = vmatpush1.msra.mxu0 0.0
  %277 = vmatprep.subr.mxu0 0.0
  %278 = vmatpush1.msra.mxu0 0.0
  %279 = vmatprep.subr.mxu0 0.0
  %280 = vmatpush1.msra.mxu0 0.0
  %281 = vmatprep.subr.mxu0 0.0
  %282 = vmatpush1.msra.mxu0 0.0
  %283 = vmatprep.subr.mxu0 0.0
  %284 = vmatpush1.msra.mxu0 0.0
  %285 = vmatprep.subr.mxu0 0.0
  %286 = vmatpush1.msra.mxu0 0.0
  %287 = vmatprep.subr.mxu0 0.0
  %288 = vmatpush1.msra.mxu0 0.0
  %289 = vmatprep.subr.mxu0 0.0
  %290 = vmatpush1.msra.mxu0 0.0
  %291 = vmatprep.subr.mxu0 0.0
  %292 = vmatpush1.msra.mxu0 0.0
  %293 = vmatprep.subr.mxu0 0.0
  %294 = vmatpush1.msra.mxu0 0.0
  %295 = vmatprep.subr.mxu0 0.0
  %296 = vmatpush1.msra.mxu0 0.0
  %297 = vmatprep.subr.mxu0 0.0
  %298 = vmatpush1.msra.mxu0 0.0
  %299 = vmatprep.subr.mxu0 0.0
  %300 = vmatpush1.msra.mxu0 0.0
  %301 = vmatprep.subr.mxu0 0.0
  %302 = vmatpush1.msra.mxu0 0.0
  %303 = vmatprep.subr.mxu0 0.0
  %304 = vmatpush1.msra.mxu0 0.0
  %305 = vmatprep.mubr.f32.mxu0 0.0
  %306 = vmatmul.mubr.f32.gmra.mrb[0].mxu0 %v134
  %v307 = vpop.f32.mrb[0].mxu0
  %v308 = vadd.f32 0.0, %v307
  %v309 = vpop.f32.mrb[0].mxu0
  %310 = vmatprep.mubr.f32.mxu0 0.0
  %311 = vmatmul.mubr.f32.gmra.mrb[0].mxu0 %v137
  %v312 = vpop.f32.mrb[0].mxu0
  %v313 = vadd.f32 0.0, %v312
  %v314 = vpop.f32.mrb[0].mxu0
  %315 = vmatprep.mubr.f32.mxu0 0.0
  %316 = vmatmul.mubr.f32.gmra.mrb[0].mxu0 %v140
  %v317 = vpop.f32.mrb[0].mxu0
  %v318 = vadd.f32 0.0, %v317
  %v319 = vpop.f32.mrb[0].mxu0
  %320 = vmatprep.mubr.f32.mxu0 0.0
  %321 = vmatmul.mubr.f32.gmra.mrb[0].mxu0 %v143
  %v322 = vpop.f32.mrb[0].mxu0
  %v323 = vadd.f32 0.0, %v322
  %v324 = vpop.f32.mrb[0].mxu0
  %325 = vmatprep.mubr.f32.mxu0 0.0
  %326 = vmatmul.mubr.f32.gmra.mrb[0].mxu0 %v146
  %v327 = vpop.f32.mrb[0].mxu0
  %v328 = vadd.f32 0.0, %v327
  %v329 = vpop.f32.mrb[0].mxu0
  %330 = vmatprep.mubr.f32.mxu0 0.0
  %331 = vmatmul.mubr.f32.gmra.mrb[0].mxu0 %v149
  %v332 = vpop.f32.mrb[0].mxu0
  %v333 = vadd.f32 0.0, %v332
  %v334 = vpop.f32.mrb[0].mxu0
  %335 = vmatprep.mubr.f32.mxu0 0.0
  %336 = vmatmul.mubr.f32.gmra.mrb[0].mxu0 %v152
  %v337 = vpop.f32.mrb[0].mxu0
  %v338 = vadd.f32 0.0, %v337
  %v339 = vpop.f32.mrb[0].mxu0
  %340 = vmatprep.mubr.f32.mxu0 0.0
  %341 = vmatmul.mubr.f32.gmra.mrb[0].mxu0 %v155
  %v342 = vpop.f32.mrb[0].mxu0
  %v343 = vadd.f32 0.0, %v342
  %v344 = vpop.f32.mrb[0].mxu0
  %345 = vmatprep.mubr.f32.mxu0 0.0
  %346 = vmatmul.mubr.f32.gmra.mrb[0].mxu0 %v158
  %v347 = vpop.f32.mrb[0].mxu0
  %v348 = vadd.f32 0.0, %v347
  %v349 = vpop.f32.mrb[0].mxu0
  %350 = vmatprep.mubr.f32.mxu0 0.0
  %351 = vmatmul.mubr.f32.gmra.mrb[0].mxu0 %v161
  %v352 = vpop.f32.mrb[0].mxu0
  %v353 = vadd.f32 0.0, %v352
  %v354 = vpop.f32.mrb[0].mxu0
  %355 = vmatprep.mubr.f32.mxu0 0.0
  %356 = vmatmul.mubr.f32.gmra.mrb[0].mxu0 %v164
  %v357 = vpop.f32.mrb[0].mxu0
  %v358 = vadd.f32 0.0, %v357
  %v359 = vpop.f32.mrb[0].mxu0
  %360 = vmatprep.mubr.f32.mxu0 0.0
  %361 = vmatmul.mubr.f32.gmra.mrb[0].mxu0 %v167
  %v362 = vpop.f32.mrb[0].mxu0
  %v363 = vadd.f32 0.0, %v362
  %v364 = vpop.f32.mrb[0].mxu0
  %365 = vmatprep.mubr.f32.mxu0 0.0
  %366 = vmatmul.mubr.f32.gmra.mrb[0].mxu0 %v170
  %v367 = vpop.f32.mrb[0].mxu0
  %v368 = vadd.f32 0.0, %v367
  %v369 = vpop.f32.mrb[0].mxu0
  %370 = vmatprep.mubr.f32.mxu0 0.0
  %371 = vmatmul.mubr.f32.gmra.mrb[0].mxu0 %v173
  %v372 = vpop.f32.mrb[0].mxu0
  %v373 = vadd.f32 0.0, %v372
  %v374 = vpop.f32.mrb[0].mxu0
  %375 = vmatprep.mubr.f32.mxu0 0.0
  %376 = vmatmul.mubr.f32.gmra.mrb[0].mxu0 %v176
  %v377 = vpop.f32.mrb[0].mxu0
  %v378 = vadd.f32 0.0, %v377
  %v379 = vpop.f32.mrb[0].mxu0
  %380 = vmatprep.mubr.f32.mxu0 0.0
  %381 = vmatmul.mubr.f32.gmra.mrb[0].mxu0 %v179
  %v382 = vpop.f32.mrb[0].mxu0
  %v383 = vadd.f32 0.0, %v382
  %v384 = vpop.f32.mrb[0].mxu0
  %385 = vmatprep.mubr.f32.mxu0 0.0
  %386 = vmatmul.mubr.f32.gmra.mrb[0].mxu0 %v182
  %v387 = vpop.f32.mrb[0].mxu0
  %v388 = vadd.f32 0.0, %v387
  %v389 = vpop.f32.mrb[0].mxu0
  %390 = vmatprep.mubr.f32.mxu0 0.0
  %391 = vmatmul.mubr.f32.gmra.mrb[0].mxu0 %v185
  %v392 = vpop.f32.mrb[0].mxu0
  %v393 = vadd.f32 0.0, %v392
  %v394 = vpop.f32.mrb[0].mxu0
  %395 = vmatprep.mubr.f32.mxu0 0.0
  %396 = vmatmul.mubr.f32.gmra.mrb[0].mxu0 %v188
  %v397 = vpop.f32.mrb[0].mxu0
  %v398 = vadd.f32 0.0, %v397
  %v399 = vpop.f32.mrb[0].mxu0
  %400 = vmatprep.mubr.f32.mxu0 0.0
  %401 = vmatmul.mubr.f32.gmra.mrb[0].mxu0 %v191
  %v402 = vpop.f32.mrb[0].mxu0
  %v403 = vadd.f32 0.0, %v402
  %v404 = vpop.f32.mrb[0].mxu0
  %405 = vmatprep.mubr.f32.mxu0 0.0
  %406 = vmatmul.mubr.f32.gmra.mrb[0].mxu0 %v194
  %v407 = vpop.f32.mrb[0].mxu0
  %v408 = vadd.f32 0.0, %v407
  %v409 = vpop.f32.mrb[0].mxu0
  %410 = vmatprep.mubr.f32.mxu0 0.0
  %411 = vmatmul.mubr.f32.gmra.mrb[0].mxu0 %v197
  %v412 = vpop.f32.mrb[0].mxu0
  %v413 = vadd.f32 0.0, %v412
  %v414 = vpop.f32.mrb[0].mxu0
  %415 = vmatprep.mubr.f32.mxu0 0.0
  %416 = vmatmul.mubr.f32.gmra.mrb[0].mxu0 %v200
  %v417 = vpop.f32.mrb[0].mxu0
  %v418 = vadd.f32 0.0, %v417
  %v419 = vpop.f32.mrb[0].mxu0
  %420 = vmatprep.mubr.f32.mxu0 0.0
  %421 = vmatmul.mubr.f32.gmra.mrb[0].mxu0 %v203
  %v422 = vpop.f32.mrb[0].mxu0
  %v423 = vadd.f32 0.0, %v422
  %v424 = vpop.f32.mrb[0].mxu0
  %425 = vmatprep.mubr.f32.mxu0 0.0
  %426 = vmatmul.mubr.f32.gmra.mrb[0].mxu0 %v206
  %v427 = vpop.f32.mrb[0].mxu0
  %v428 = vadd.f32 0.0, %v427
  %v429 = vpop.f32.mrb[0].mxu0
  %430 = vmatprep.mubr.f32.mxu0 0.0
  %431 = vmatmul.mubr.f32.gmra.mrb[0].mxu0 %v209
  %v432 = vpop.f32.mrb[0].mxu0
  %v433 = vadd.f32 0.0, %v432
  %v434 = vpop.f32.mrb[0].mxu0
  %435 = vmatprep.mubr.f32.mxu0 0.0
  %436 = vmatmul.mubr.f32.gmra.mrb[0].mxu0 %v212
  %v437 = vpop.f32.mrb[0].mxu0
  %v438 = vadd.f32 0.0, %v437
  %v439 = vpop.f32.mrb[0].mxu0
  %440 = vmatprep.mubr.f32.mxu0 0.0
  %441 = vmatmul.mubr.f32.gmra.mrb[0].mxu0 %v215
  %v442 = vpop.f32.mrb[0].mxu0
  %v443 = vadd.f32 0.0, %v442
  %v444 = vpop.f32.mrb[0].mxu0
  %445 = vmatprep.mubr.f32.mxu0 0.0
  %446 = vmatmul.mubr.f32.gmra.mrb[0].mxu0 %v218
  %v447 = vpop.f32.mrb[0].mxu0
  %v448 = vadd.f32 0.0, %v447
  %v449 = vpop.f32.mrb[0].mxu0
  %450 = vmatprep.mubr.f32.mxu0 0.0
  %451 = vmatmul.mubr.f32.gmra.mrb[0].mxu0 %v221
  %v452 = vpop.f32.mrb[0].mxu0
  %v453 = vadd.f32 0.0, %v452
  %v454 = vpop.f32.mrb[0].mxu0
  %455 = vmatprep.mubr.f32.mxu0 0.0
  %456 = vmatmul.mubr.f32.gmra.mrb[0].mxu0 %v224
  %v457 = vpop.f32.mrb[0].mxu0
  %v458 = vadd.f32 0.0, %v457
  %v459 = vpop.f32.mrb[0].mxu0
  %460 = vmatprep.mubr.f32.mxu0 0.0
  %461 = vmatmul.mubr.f32.gmra.mrb[0].mxu0 %v227
  %v462 = vpop.f32.mrb[0].mxu0
  %v463 = vadd.f32 0.0, %v462
  %v464 = vpop.f32.mrb[0].mxu0
  %465 = vmatprep.mubr.f32.mxu0 0.0
  %466 = vmatmul.mubr.f32.gmra.mrb[0].mxu0 %v230
  %v467 = vpop.f32.mrb[0].mxu0
  %v468 = vadd.f32 0.0, %v467
  %v469 = vpop.f32.mrb[0].mxu0
  %470 = vmatprep.mubr.f32.mxu0 0.0
  %471 = vmatmul.mubr.f32.gmra.mrb[0].mxu0 %v233
  %v472 = vpop.f32.mrb[0].mxu0
  %v473 = vadd.f32 0.0, %v472
  %v474 = vpop.f32.mrb[0].mxu0
  %475 = vmatprep.mubr.f32.mxu0 0.0
  %476 = vmatmul.mubr.f32.gmra.mrb[0].mxu0 %v236
  %v477 = vpop.f32.mrb[0].mxu0
  %v478 = vadd.f32 0.0, %v477
  %v479 = vpop.f32.mrb[0].mxu0
  %480 = vmatprep.mubr.f32.mxu0 0.0
  %481 = vmatmul.mubr.f32.gmra.mrb[0].mxu0 %v239
  %v482 = vpop.f32.mrb[0].mxu0
  %v483 = vadd.f32 0.0, %v482
  %v484 = vpop.f32.mrb[0].mxu0
  %485 = vdwg.mxu0
  %v486 = vadd.f32 %v58, %v308
  %v487 = vadd.f32 %v59, %v313
  %v488 = vadd.f32 %v60, %v318
  %v489 = vadd.f32 %v61, %v323
  %v490 = vadd.f32 %v62, %v328
  %v491 = vadd.f32 %v63, %v333
  %v492 = vadd.f32 %v64, %v338
  %v493 = vadd.f32 %v65, %v343
  %v494 = vadd.f32 %v66, %v348
  %v495 = vadd.f32 %v67, %v353
  %v496 = vadd.f32 %v68, %v358
  %v497 = vadd.f32 %v69, %v363
  %v498 = vadd.f32 %v70, %v368
  %v499 = vadd.f32 %v71, %v373
  %v500 = vadd.f32 %v72, %v378
  %v501 = vadd.f32 %v73, %v383
  %v502 = vadd.f32 %v74, %v388
  %v503 = vadd.f32 %v75, %v393
  %v504 = vadd.f32 %v76, %v398
  %v505 = vadd.f32 %v77, %v403
  %v506 = vadd.f32 %v78, %v408
  %v507 = vadd.f32 %v79, %v413
  %v508 = vadd.f32 %v80, %v418
  %v509 = vadd.f32 %v81, %v423
  %v510 = vadd.f32 %v82, %v428
  %v511 = vadd.f32 %v83, %v433
  %v512 = vadd.f32 %v84, %v438
  %v513 = vadd.f32 %v85, %v443
  %v514 = vadd.f32 %v86, %v448
  %v515 = vadd.f32 %v87, %v453
  %v516 = vadd.f32 %v88, %v458
  %v517 = vadd.f32 %v89, %v463
  %v518 = vadd.f32 %v90, %v468
  %v519 = vadd.f32 %v91, %v473
  %v520 = vadd.f32 %v92, %v478
  %v521 = vadd.f32 %v93, %v483
  %vm522 = vcmask 64512
  %523 = vst.msk [vmem:[#allocation2] sm:$0xff] %vm522, %v486
  %524 = vst.msk [vmem:[#allocation2 + $0x8] sm:$0xff] %vm522, %v487
  %525 = vst.msk [vmem:[#allocation2 + $0x10] sm:$0xff] %vm522, %v488
  %526 = vst.msk [vmem:[#allocation2 + $0x18] sm:$0xff] %vm522, %v489
  %527 = vst.msk [vmem:[#allocation2 + $0x20] sm:$0xff] %vm522, %v490
  %528 = vst.msk [vmem:[#allocation2 + $0x28] sm:$0xff] %vm522, %v491
  %529 = vst.msk [vmem:[#allocation2 + $0x30] sm:$0xff] %vm522, %v492
  %530 = vst.msk [vmem:[#allocation2 + $0x38] sm:$0xff] %vm522, %v493
  %531 = vst.msk [vmem:[#allocation2 + $0x40] sm:$0xff] %vm522, %v494
  %532 = vst.msk [vmem:[#allocation2 + $0x48] sm:$0xff] %vm522, %v495
  %533 = vst.msk [vmem:[#allocation2 + $0x50] sm:$0xff] %vm522, %v496
  %534 = vst.msk [vmem:[#allocation2 + $0x58] sm:$0xff] %vm522, %v497
  %535 = vst.msk [vmem:[#allocation2 + $0x60] sm:$0xff] %vm522, %v498
  %536 = vst.msk [vmem:[#allocation2 + $0x68] sm:$0xff] %vm522, %v499
  %537 = vst.msk [vmem:[#allocation2 + $0x70] sm:$0xff] %vm522, %v500
  %538 = vst.msk [vmem:[#allocation2 + $0x78] sm:$0xff] %vm522, %v501
  %539 = vst.msk [vmem:[#allocation2 + $0x80] sm:$0xff] %vm522, %v502
  %540 = vst.msk [vmem:[#allocation2 + $0x88] sm:$0xff] %vm522, %v503
  %541 = vst.msk [vmem:[#allocation2 + $0x90] sm:$0xff] %vm522, %v504
  %542 = vst.msk [vmem:[#allocation2 + $0x98] sm:$0xff] %vm522, %v505
  %543 = vst.msk [vmem:[#allocation2 + $0xa0] sm:$0xff] %vm522, %v506
  %544 = vst.msk [vmem:[#allocation2 + $0xa8] sm:$0xff] %vm522, %v507
  %545 = vst.msk [vmem:[#allocation2 + $0xb0] sm:$0xff] %vm522, %v508
  %546 = vst.msk [vmem:[#allocation2 + $0xb8] sm:$0xff] %vm522, %v509
  %547 = vst.msk [vmem:[#allocation2 + $0xc0] sm:$0xff] %vm522, %v510
  %548 = vst.msk [vmem:[#allocation2 + $0xc8] sm:$0xff] %vm522, %v511
  %549 = vst.msk [vmem:[#allocation2 + $0xd0] sm:$0xff] %vm522, %v512
  %550 = vst.msk [vmem:[#allocation2 + $0xd8] sm:$0xff] %vm522, %v513
  %551 = vst.msk [vmem:[#allocation2 + $0xe0] sm:$0xff] %vm522, %v514
  %552 = vst.msk [vmem:[#allocation2 + $0xe8] sm:$0xff] %vm522, %v515
  %553 = vst.msk [vmem:[#allocation2 + $0xf0] sm:$0xff] %vm522, %v516
  %554 = vst.msk [vmem:[#allocation2 + $0xf8] sm:$0xff] %vm522, %v517
  %555 = vst.msk [vmem:[#allocation2 + $0x100] sm:$0xff] %vm522, %v518
  %556 = vst.msk [vmem:[#allocation2 + $0x108] sm:$0xff] %vm522, %v519
  %557 = vst.msk [vmem:[#allocation2 + $0x110] sm:$0xff] %vm522, %v520
  %558 = vst.msk [vmem:[#allocation2 + $0x118] sm:$0xff] %vm522, %v521
  // Predicated region
  $region22: #{tpu_custom_call.1} parent=0 // pred_check
    %p559 = pneg %p17
  $region23: #{tpu_custom_call.1} parent=0 // pred_check_branch
    %561 = sbr.rel (%p559) target = $region25
  $region24: #{tpu_custom_call.1} parent=0 // pred_region
    %v562 = vld [vmem:[#allocation2] sm:$0xff]
    %v563 = vld [vmem:[#allocation2 + $0x8] sm:$0xff]
    %v564 = vld [vmem:[#allocation2 + $0x10] sm:$0xff]
    %v565 = vld [vmem:[#allocation2 + $0x18] sm:$0xff]
    %v566 = vld [vmem:[#allocation2 + $0x20] sm:$0xff]
    %v567 = vld [vmem:[#allocation2 + $0x28] sm:$0xff]
    %v568 = vld [vmem:[#allocation2 + $0x30] sm:$0xff]
    %v569 = vld [vmem:[#allocation2 + $0x38] sm:$0xff]
    %v570 = vld [vmem:[#allocation2 + $0x40] sm:$0xff]
    %v571 = vld [vmem:[#allocation2 + $0x48] sm:$0xff]
    %v572 = vld [vmem:[#allocation2 + $0x50] sm:$0xff]
    %v573 = vld [vmem:[#allocation2 + $0x58] sm:$0xff]
    %v574 = vld [vmem:[#allocation2 + $0x60] sm:$0xff]
    %v575 = vld [vmem:[#allocation2 + $0x68] sm:$0xff]
    %v576 = vld [vmem:[#allocation2 + $0x70] sm:$0xff]
    %v577 = vld [vmem:[#allocation2 + $0x78] sm:$0xff]
    %v578 = vld [vmem:[#allocation2 + $0x80] sm:$0xff]
    %v579 = vld [vmem:[#allocation2 + $0x88] sm:$0xff]
    %v580 = vld [vmem:[#allocation2 + $0x90] sm:$0xff]
    %v581 = vld [vmem:[#allocation2 + $0x98] sm:$0xff]
    %v582 = vld [vmem:[#allocation2 + $0xa0] sm:$0xff]
    %v583 = vld [vmem:[#allocation2 + $0xa8] sm:$0xff]
    %v584 = vld [vmem:[#allocation2 + $0xb0] sm:$0xff]
    %v585 = vld [vmem:[#allocation2 + $0xb8] sm:$0xff]
    %v586 = vld [vmem:[#allocation2 + $0xc0] sm:$0xff]
    %v587 = vld [vmem:[#allocation2 + $0xc8] sm:$0xff]
    %v588 = vld [vmem:[#allocation2 + $0xd0] sm:$0xff]
    %v589 = vld [vmem:[#allocation2 + $0xd8] sm:$0xff]
    %v590 = vld [vmem:[#allocation2 + $0xe0] sm:$0xff]
    %v591 = vld [vmem:[#allocation2 + $0xe8] sm:$0xff]
    %v592 = vld [vmem:[#allocation2 + $0xf0] sm:$0xff]
    %v593 = vld [vmem:[#allocation2 + $0xf8] sm:$0xff]
    %v594 = vld [vmem:[#allocation2 + $0x100] sm:$0xff]
    %v595 = vld [vmem:[#allocation2 + $0x108] sm:$0xff]
    %v596 = vld [vmem:[#allocation2 + $0x110] sm:$0xff]
    %v597 = vld [vmem:[#allocation2 + $0x118] sm:$0xff]
    %v598 = vld [vmem:[%s2] sm:$0x1]
    %v600 = vlaneseq
    %v601 = vshrl.u32 %v600, 7
    %v602 = vsub.s32 0, %v601
    %v603 = vrot.slane %v598, %v602
    %v605 = vadd.f32 %v562, %v603
    %v606 = vadd.f32 %v563, %v603
    %v607 = vadd.f32 %v564, %v603
    %v608 = vadd.f32 %v565, %v603
    %v609 = vadd.f32 %v566, %v603
    %v610 = vadd.f32 %v567, %v603
    %v611 = vadd.f32 %v568, %v603
    %v612 = vadd.f32 %v569, %v603
    %v613 = vadd.f32 %v570, %v603
    %v614 = vadd.f32 %v571, %v603
    %v615 = vadd.f32 %v572, %v603
    %v616 = vadd.f32 %v573, %v603
    %v617 = vadd.f32 %v574, %v603
    %v618 = vadd.f32 %v575, %v603
    %v619 = vadd.f32 %v576, %v603
    %v620 = vadd.f32 %v577, %v603
    %v621 = vadd.f32 %v578, %v603
    %v622 = vadd.f32 %v579, %v603
    %v623 = vadd.f32 %v580, %v603
    %v624 = vadd.f32 %v581, %v603
    %v625 = vadd.f32 %v582, %v603
    %v626 = vadd.f32 %v583, %v603
    %v627 = vadd.f32 %v584, %v603
    %v628 = vadd.f32 %v585, %v603
    %v629 = vadd.f32 %v586, %v603
    %v630 = vadd.f32 %v587, %v603
    %v631 = vadd.f32 %v588, %v603
    %v632 = vadd.f32 %v589, %v603
    %v633 = vadd.f32 %v590, %v603
    %v634 = vadd.f32 %v591, %v603
    %v635 = vadd.f32 %v592, %v603
    %v636 = vadd.f32 %v593, %v603
    %v637 = vadd.f32 %v594, %v603
    %v638 = vadd.f32 %v595, %v603
    %v639 = vadd.f32 %v596, %v603
    %v640 = vadd.f32 %v597, %v603
    %vm641 = vcmp.ge.f32.partialorder %v605, 0.0
    %vm642 = vcmp.ge.f32.partialorder %v606, 0.0
    %vm643 = vcmp.ge.f32.partialorder %v607, 0.0
    %vm644 = vcmp.ge.f32.partialorder %v608, 0.0
    %vm645 = vcmp.ge.f32.partialorder %v609, 0.0
    %vm646 = vcmp.ge.f32.partialorder %v610, 0.0
    %vm647 = vcmp.ge.f32.partialorder %v611, 0.0
    %vm648 = vcmp.ge.f32.partialorder %v612, 0.0
    %vm649 = vcmp.ge.f32.partialorder %v613, 0.0
    %vm650 = vcmp.ge.f32.partialorder %v614, 0.0
    %vm651 = vcmp.ge.f32.partialorder %v615, 0.0
    %vm652 = vcmp.ge.f32.partialorder %v616, 0.0
    %vm653 = vcmp.ge.f32.partialorder %v617, 0.0
    %vm654 = vcmp.ge.f32.partialorder %v618, 0.0
    %vm655 = vcmp.ge.f32.partialorder %v619, 0.0
    %vm656 = vcmp.ge.f32.partialorder %v620, 0.0
    %vm657 = vcmp.ge.f32.partialorder %v621, 0.0
    %vm658 = vcmp.ge.f32.partialorder %v622, 0.0
    %vm659 = vcmp.ge.f32.partialorder %v623, 0.0
    %vm660 = vcmp.ge.f32.partialorder %v624, 0.0
    %vm661 = vcmp.ge.f32.partialorder %v625, 0.0
    %vm662 = vcmp.ge.f32.partialorder %v626, 0.0
    %vm663 = vcmp.ge.f32.partialorder %v627, 0.0
    %vm664 = vcmp.ge.f32.partialorder %v628, 0.0
    %vm665 = vcmp.ge.f32.partialorder %v629, 0.0
    %vm666 = vcmp.ge.f32.partialorder %v630, 0.0
    %vm667 = vcmp.ge.f32.partialorder %v631, 0.0
    %vm668 = vcmp.ge.f32.partialorder %v632, 0.0
    %vm669 = vcmp.ge.f32.partialorder %v633, 0.0
    %vm670 = vcmp.ge.f32.partialorder %v634, 0.0
    %vm671 = vcmp.ge.f32.partialorder %v635, 0.0
    %vm672 = vcmp.ge.f32.partialorder %v636, 0.0
    %vm673 = vcmp.ge.f32.partialorder %v637, 0.0
    %vm674 = vcmp.ge.f32.partialorder %v638, 0.0
    %vm675 = vcmp.ge.f32.partialorder %v639, 0.0
    %vm676 = vcmp.ge.f32.partialorder %v640, 0.0
    %v677 = vld [vmem:[%s3] sm:$0x1]
    %v679 = vlaneseq
    %v680 = vshrl.u32 %v679, 7
    %v681 = vsub.s32 0, %v680
    %v682 = vrot.slane %v677, %v681
    %v684 = vmul.f32 %v682, %v605
    %v685 = vmul.f32 %v682, %v606
    %v686 = vmul.f32 %v682, %v607
    %v687 = vmul.f32 %v682, %v608
    %v688 = vmul.f32 %v682, %v609
    %v689 = vmul.f32 %v682, %v610
    %v690 = vmul.f32 %v682, %v611
    %v691 = vmul.f32 %v682, %v612
    %v692 = vmul.f32 %v682, %v613
    %v693 = vmul.f32 %v682, %v614
    %v694 = vmul.f32 %v682, %v615
    %v695 = vmul.f32 %v682, %v616
    %v696 = vmul.f32 %v682, %v617
    %v697 = vmul.f32 %v682, %v618
    %v698 = vmul.f32 %v682, %v619
    %v699 = vmul.f32 %v682, %v620
    %v700 = vmul.f32 %v682, %v621
    %v701 = vmul.f32 %v682, %v622
    %v702 = vmul.f32 %v682, %v623
    %v703 = vmul.f32 %v682, %v624
    %v704 = vmul.f32 %v682, %v625
    %v705 = vmul.f32 %v682, %v626
    %v706 = vmul.f32 %v682, %v627
    %v707 = vmul.f32 %v682, %v628
    %v708 = vmul.f32 %v682, %v629
    %v709 = vmul.f32 %v682, %v630
    %v710 = vmul.f32 %v682, %v631
    %v711 = vmul.f32 %v682, %v632
    %v712 = vmul.f32 %v682, %v633
    %v713 = vmul.f32 %v682, %v634
    %v714 = vmul.f32 %v682, %v635
    %v715 = vmul.f32 %v682, %v636
    %v716 = vmul.f32 %v682, %v637
    %v717 = vmul.f32 %v682, %v638
    %v718 = vmul.f32 %v682, %v639
    %v719 = vmul.f32 %v682, %v640
    %v720 = vsel %vm641, %v605, %v684
    %v721 = vsel %vm642, %v606, %v685
    %v722 = vsel %vm643, %v607, %v686
    %v723 = vsel %vm644, %v608, %v687
    %v724 = vsel %vm645, %v609, %v688
    %v725 = vsel %vm646, %v610, %v689
    %v726 = vsel %vm647, %v611, %v690
    %v727 = vsel %vm648, %v612, %v691
    %v728 = vsel %vm649, %v613, %v692
    %v729 = vsel %vm650, %v614, %v693
    %v730 = vsel %vm651, %v615, %v694
    %v731 = vsel %vm652, %v616, %v695
    %v732 = vsel %vm653, %v617, %v696
    %v733 = vsel %vm654, %v618, %v697
    %v734 = vsel %vm655, %v619, %v698
    %v735 = vsel %vm656, %v620, %v699
    %v736 = vsel %vm657, %v621, %v700
    %v737 = vsel %vm658, %v622, %v701
    %v738 = vsel %vm659, %v623, %v702
    %v739 = vsel %vm660, %v624, %v703
    %v740 = vsel %vm661, %v625, %v704
    %v741 = vsel %vm662, %v626, %v705
    %v742 = vsel %vm663, %v627, %v706
    %v743 = vsel %vm664, %v628, %v707
    %v744 = vsel %vm665, %v629, %v708
    %v745 = vsel %vm666, %v630, %v709
    %v746 = vsel %vm667, %v631, %v710
    %v747 = vsel %vm668, %v632, %v711
    %v748 = vsel %vm669, %v633, %v712
    %v749 = vsel %vm670, %v634, %v713
    %v750 = vsel %vm671, %v635, %v714
    %v751 = vsel %vm672, %v636, %v715
    %v752 = vsel %vm673, %v637, %v716
    %v753 = vsel %vm674, %v638, %v717
    %v754 = vsel %vm675, %v639, %v718
    %v755 = vsel %vm676, %v640, %v719
    %756 = vst.msk [vmem:[%s4] sm:$0xff] %vm522, %v720
    %757 = vst.msk [vmem:[%s4 + $0x8] sm:$0xff] %vm522, %v721
    %758 = vst.msk [vmem:[%s4 + $0x10] sm:$0xff] %vm522, %v722
    %759 = vst.msk [vmem:[%s4 + $0x18] sm:$0xff] %vm522, %v723
    %760 = vst.msk [vmem:[%s4 + $0x20] sm:$0xff] %vm522, %v724
    %761 = vst.msk [vmem:[%s4 + $0x28] sm:$0xff] %vm522, %v725
    %762 = vst.msk [vmem:[%s4 + $0x30] sm:$0xff] %vm522, %v726
    %763 = vst.msk [vmem:[%s4 + $0x38] sm:$0xff] %vm522, %v727
    %764 = vst.msk [vmem:[%s4 + $0x40] sm:$0xff] %vm522, %v728
    %765 = vst.msk [vmem:[%s4 + $0x48] sm:$0xff] %vm522, %v729
    %766 = vst.msk [vmem:[%s4 + $0x50] sm:$0xff] %vm522, %v730
    %767 = vst.msk [vmem:[%s4 + $0x58] sm:$0xff] %vm522, %v731
    %768 = vst.msk [vmem:[%s4 + $0x60] sm:$0xff] %vm522, %v732
    %769 = vst.msk [vmem:[%s4 + $0x68] sm:$0xff] %vm522, %v733
    %770 = vst.msk [vmem:[%s4 + $0x70] sm:$0xff] %vm522, %v734
    %771 = vst.msk [vmem:[%s4 + $0x78] sm:$0xff] %vm522, %v735
    %772 = vst.msk [vmem:[%s4 + $0x80] sm:$0xff] %vm522, %v736
    %773 = vst.msk [vmem:[%s4 + $0x88] sm:$0xff] %vm522, %v737
    %774 = vst.msk [vmem:[%s4 + $0x90] sm:$0xff] %vm522, %v738
    %775 = vst.msk [vmem:[%s4 + $0x98] sm:$0xff] %vm522, %v739
    %776 = vst.msk [vmem:[%s4 + $0xa0] sm:$0xff] %vm522, %v740
    %777 = vst.msk [vmem:[%s4 + $0xa8] sm:$0xff] %vm522, %v741
    %778 = vst.msk [vmem:[%s4 + $0xb0] sm:$0xff] %vm522, %v742
    %779 = vst.msk [vmem:[%s4 + $0xb8] sm:$0xff] %vm522, %v743
    %780 = vst.msk [vmem:[%s4 + $0xc0] sm:$0xff] %vm522, %v744
    %781 = vst.msk [vmem:[%s4 + $0xc8] sm:$0xff] %vm522, %v745
    %782 = vst.msk [vmem:[%s4 + $0xd0] sm:$0xff] %vm522, %v746
    %783 = vst.msk [vmem:[%s4 + $0xd8] sm:$0xff] %vm522, %v747
    %784 = vst.msk [vmem:[%s4 + $0xe0] sm:$0xff] %vm522, %v748
    %785 = vst.msk [vmem:[%s4 + $0xe8] sm:$0xff] %vm522, %v749
    %786 = vst.msk [vmem:[%s4 + $0xf0] sm:$0xff] %vm522, %v750
    %787 = vst.msk [vmem:[%s4 + $0xf8] sm:$0xff] %vm522, %v751
    %788 = vst.msk [vmem:[%s4 + $0x100] sm:$0xff] %vm522, %v752
    %789 = vst.msk [vmem:[%s4 + $0x108] sm:$0xff] %vm522, %v753
    %790 = vst.msk [vmem:[%s4 + $0x110] sm:$0xff] %vm522, %v754
    %791 = vst.msk [vmem:[%s4 + $0x118] sm:$0xff] %vm522, %v755
  $region25: #{tpu_custom_call.1} parent=0 // pred_fallthru
    _
  // Predicated region
  $region26: #{tpu_custom_call.1} parent=0 // pred_check
    _
  $region27: #{tpu_custom_call.1} parent=0 // pred_check_branch
    %793 = sbr.rel (0) target = $region29
  $region28: #{tpu_custom_call.1} parent=0 // pred_region
    _
  $region29: #{tpu_custom_call.1} parent=0 // pred_fallthru
    _
  // Predicated region
  $region30: #{tpu_custom_call.1} parent=0 // pred_check
    _
  $region31: #{tpu_custom_call.1} parent=0 // pred_check_branch
    %795 = sbr.rel (0) target = $region33
  $region32: #{tpu_custom_call.1} parent=0 // pred_region
    _
  $region33: #{tpu_custom_call.1} parent=0 // pred_fallthru
    _

</llo_original>
